<compile_context>
chip_gen: v6e
topology: v6e:2x2x1
jax: 0.10.0
libtpu: 0.0.40
codegen_flags: <defaults>
</compile_context>

<pallas_src>
import functools

import jax
import jax.numpy as jnp
from jax.experimental import pallas as pl
from jax.experimental.pallas import tpu as pltpu

ENERGY_MIN = -10.0
ENERGY_MAX = 10.0
TEMP_MAX = 1.0

_LANE = 128           # vreg lane width
_SUBLANE = 8          # f32 sublane count
_MAX_TB = 1024        # max batch tile: amortizes ~0.35 us per grid step (v5e/v6e)
_SPLIT_THRESHOLD = 256  # above this, force >= 2 grid steps so v7x's 2 TCs both work


def _round_up(x, m):
    return (x + m - 1) // m * m


def _policy_kernel(num_actions, x_ref, w1_ref, b1_ref, w2_ref, b2_ref,
                   wh_ref, bh_ref, out_ref):
    # Trunk: Linear -> ReLU -> Linear -> ReLU (f32 to hold the 1e-5 self-test).
    x = x_ref[...]
    h = jnp.maximum(
        jnp.dot(x, w1_ref[...], preferred_element_type=jnp.float32) + b1_ref[...], 0.0)
    h = jnp.maximum(
        jnp.dot(h, w2_ref[...], preferred_element_type=jnp.float32) + b2_ref[...], 0.0)

    # Fused head: one MXU pass producing [energy lanes | temp lane | zero pad].
    z = jnp.dot(h, wh_ref[...], preferred_element_type=jnp.float32) + bh_ref[...]

    # Padded lanes of wh/bh are exactly zero -> z == 0 there and clip(0) == 0, so a
    # single select (lane == num_actions) is enough; no extra `col < A` mask.
    energy = jnp.clip(z, ENERGY_MIN, ENERGY_MAX)
    # sigmoid(z) = 0.5*(tanh(z/2)+1): one EUP push per vreg instead of exp + recip.
    temp = (0.5 * TEMP_MAX) * (jnp.tanh(0.5 * z) + 1.0)
    col = jax.lax.broadcasted_iota(jnp.int32, z.shape, 1)
    out_ref[...] = jnp.where(col == num_actions, temp, energy)


def pack_params(params):
    """One-time packing: fuse the energy/temp heads into a lane-dense (H, 128) weight.

    Call this ONCE after init / parameter update, outside the per-step forward, so the
    jitted forward contains no concat/pad ops.
    """
    num_actions = params["we"].shape[1]
    head_w = jnp.concatenate([params["we"], params["wt"]], axis=1)   # (H, A+1)
    head_b = jnp.concatenate([params["be"], params["bt"]], axis=1)   # (1, A+1)
    head_pad = _round_up(num_actions + 1, _LANE)
    pad = head_pad - (num_actions + 1)
    head_w = jnp.pad(head_w, ((0, 0), (0, pad)))
    head_b = jnp.pad(head_b, ((0, 0), (0, pad)))
    packed = dict(w1=params["w1"], b1=params["b1"],
                  w2=params["w2"], b2=params["b2"],
                  wh=head_w, bh=head_b)
    return packed, num_actions


def _forward_impl(state, packed, num_actions):
    B, S = state.shape
    H = packed["w1"].shape[1]
    head_pad = packed["wh"].shape[1]

    # Batch tiling: pick the tile count first, then round the tile to the 8-row sublane,
    # so padding is at most (n_tiles * 8 - 1) rows instead of a full tile.
    n_tiles = pl.cdiv(B, _MAX_TB)
    if n_tiles == 1 and B >= _SPLIT_THRESHOLD:
        n_tiles = 2                      # let v7x's 2 TensorCores both run
    tb = _round_up(pl.cdiv(B, n_tiles), _SUBLANE)
    b_pad = tb * n_tiles
    x = state if b_pad == B else jnp.pad(state, ((0, b_pad - B), (0, 0)))

    kernel = functools.partial(_policy_kernel, num_actions)

    # Advisory cost hint for XLA scheduling around this small custom call.
    flops = 2 * b_pad * (S * H + H * H + H * head_pad)
    bytes_accessed = 4 * (b_pad * (S + head_pad)
                          + S * H + H * H + H * head_pad + 2 * H + head_pad)
    cost = pl.CostEstimate(flops=flops,
                           transcendentals=b_pad * head_pad,
                           bytes_accessed=bytes_accessed)

    out = pl.pallas_call(
        kernel,
        out_shape=jax.ShapeDtypeStruct((b_pad, head_pad), jnp.float32),
        grid_spec=pltpu.PrefetchScalarGridSpec(
            num_scalar_prefetch=0,
            grid=(n_tiles,),
            in_specs=[
                # Streamed batch tile.
                pl.BlockSpec((tb, S), lambda i: (i, 0)),
                # Weights / biases: constant index_map -> VMEM-resident across steps.
                pl.BlockSpec((S, H), lambda i: (0, 0)),
                pl.BlockSpec((1, H), lambda i: (0, 0)),
                pl.BlockSpec((H, H), lambda i: (0, 0)),
                pl.BlockSpec((1, H), lambda i: (0, 0)),
                pl.BlockSpec((H, head_pad), lambda i: (0, 0)),
                pl.BlockSpec((1, head_pad), lambda i: (0, 0)),
            ],
            out_specs=pl.BlockSpec((tb, head_pad), lambda i: (i, 0)),
        ),
        compiler_params=pltpu.CompilerParams(
            # Batch axis is embarrassingly parallel -> shard across v7x's 2 TCs.
            dimension_semantics=("parallel",),
            # Per-tile footprint at tb=1024 is ~1.2 MiB double-buffered -> far below the
            # scoped-VMEM default on every generation; no override needed.
        ),
        cost_estimate=cost,
    )(x, packed["w1"], packed["b1"], packed["w2"], packed["b2"],
      packed["wh"], packed["bh"])

    return out[:B] if b_pad != B else out


@functools.partial(jax.jit, static_argnames=("num_actions",))
def policy_forward_packed(state, packed, num_actions):
    """Packed forward: returns the lane-dense (B, 128) slab
    [energy[:A] | temp | zeros]. Preferred when the consumer can slice lazily."""
    return _forward_impl(state, packed, num_actions)


@functools.partial(jax.jit, static_argnames=("num_actions",))
def policy_forward(state, packed, num_actions):
    """PolicyNetwork.forward: returns (energy (B, A), temp (B, 1))."""
    out = _forward_impl(state, packed, num_actions)
    energy = out[:, :num_actions]
    temp = out[:, num_actions:num_actions + 1]
    return energy, temp


def init_params(key, state_dim, num_actions, hidden_dim):
    """Deterministic init mimicking PyTorch Linear default U(-1/sqrt(fan_in), 1/sqrt(fan_in)).
    Weights stored as (in, out) — i.e. the transpose of nn.Linear.weight."""
    ks = jax.random.split(key, 8)

    def lin(kw, kb, fan_in, fan_out):
        bound = 1.0 / jnp.sqrt(float(fan_in))
        w = jax.random.uniform(kw, (fan_in, fan_out), jnp.float32, -bound, bound)
        b = jax.random.uniform(kb, (1, fan_out), jnp.float32, -bound, bound)
        return w, b

    w1, b1 = lin(ks[0], ks[1], state_dim, hidden_dim)
    w2, b2 = lin(ks[2], ks[3], hidden_dim, hidden_dim)
    we, be = lin(ks[4], ks[5], hidden_dim, num_actions)
    wt, bt = lin(ks[6], ks[7], hidden_dim, 1)
    return dict(w1=w1, b1=b1, w2=w2, b2=b2, we=we, be=be, wt=wt, bt=bt)


def reference_forward(state, params):
    """Pure-JAX reference of the PyTorch forward."""
    h = jnp.maximum(state @ params["w1"] + params["b1"], 0.0)
    h = jnp.maximum(h @ params["w2"] + params["b2"], 0.0)
    energy = jnp.clip(h @ params["we"] + params["be"], ENERGY_MIN, ENERGY_MAX)
    temp = jax.nn.sigmoid(h @ params["wt"] + params["bt"]) * TEMP_MAX
    return energy, temp


if __name__ == "__main__":
    # Small, module-consistent shapes: batch=2, state_dim=16, hidden=32, num_actions=8
    B, STATE_DIM, HIDDEN_DIM, NUM_ACTIONS = 2, 16, 32, 8

    key = jax.random.PRNGKey(0)
    k_state, k_params = jax.random.split(key)
    state = jax.random.normal(k_state, (B, STATE_DIM), dtype=jnp.float32)
    params = init_params(k_params, STATE_DIM, NUM_ACTIONS, HIDDEN_DIM)

    # One-time head packing (outside the jitted forward).
    packed, num_actions = pack_params(params)

    energy, temp = policy_forward(state, packed, num_actions)
    jax.block_until_ready((energy, temp))

    # Correctness check against pure-JAX reference.
    ref_energy, ref_temp = reference_forward(state, params)
    assert energy.shape == (B, NUM_ACTIONS) and temp.shape == (B, 1)
    assert jnp.allclose(energy, ref_energy, atol=1e-5, rtol=1e-5)
    assert jnp.allclose(temp, ref_temp, atol=1e-5, rtol=1e-5)

    # Mid-size batch: forced 2-tile grid (v7x dual-TC path), minimal sublane padding.
    B2 = 520
    state2 = jax.random.normal(jax.random.PRNGKey(3), (B2, STATE_DIM), dtype=jnp.float32)
    e2, t2 = policy_forward(state2, packed, num_actions)
    jax.block_until_ready((e2, t2))
    re2, rt2 = reference_forward(state2, params)
    assert e2.shape == (B2, NUM_ACTIONS) and t2.shape == (B2, 1)
    assert jnp.allclose(e2, re2, atol=1e-5, rtol=1e-5)
    assert jnp.allclose(t2, rt2, atol=1e-5, rtol=1e-5)

    # Larger, multi-tile batch that is not a tile multiple (ragged last tile).
    B3 = 1100
    state3 = jax.random.normal(jax.random.PRNGKey(7), (B3, STATE_DIM), dtype=jnp.float32)
    e3, t3 = policy_forward(state3, packed, num_actions)
    jax.block_until_ready((e3, t3))
    re3, rt3 = reference_forward(state3, params)
    assert e3.shape == (B3, NUM_ACTIONS) and t3.shape == (B3, 1)
    assert jnp.allclose(e3, re3, atol=1e-5, rtol=1e-5)
    assert jnp.allclose(t3, rt3, atol=1e-5, rtol=1e-5)

    # Packed-output path (lane-dense (B, 128) slab; consumers can slice lazily).
    out_packed = policy_forward_packed(state, packed, num_actions)
    jax.block_until_ready(out_packed)
    assert out_packed.shape == (B, 128)
    assert jnp.allclose(out_packed[:, :NUM_ACTIONS], ref_energy, atol=1e-5, rtol=1e-5)
    assert jnp.allclose(out_packed[:, NUM_ACTIONS:NUM_ACTIONS + 1], ref_temp,
                        atol=1e-5, rtol=1e-5)

    # TODO(synk): evaluate()/get_action() do host-side categorical sampling with
    # random.choices; that control flow stays outside the kernel.
    print("KERNEL_OK")
</pallas_src>

<mosaic_0001>
module attributes {stable_mosaic.version = 11 : i64} {
  func.func @_policy_kernel(%arg0: i32, %arg1: memref<8x16xf32, #tpu.memory_space<vmem>>, %arg2: memref<16x32xf32, #tpu.memory_space<vmem>>, %arg3: memref<1x32xf32, #tpu.memory_space<vmem>>, %arg4: memref<32x32xf32, #tpu.memory_space<vmem>>, %arg5: memref<1x32xf32, #tpu.memory_space<vmem>>, %arg6: memref<32x128xf32, #tpu.memory_space<vmem>>, %arg7: memref<1x128xf32, #tpu.memory_space<vmem>>, %arg8: memref<8x128xf32, #tpu.memory_space<vmem>>) attributes {dimension_semantics = [#tpu.dimension_semantics<parallel>], iteration_bounds = array<i64: 1>, scalar_prefetch = 0 : i64, scratch_operands = 0 : i64, tpu.core_type = #tpu.core_type<tc>, window_params = [{transform_indices = @transform_0, window_bounds = array<i64: 8, 16>}, {pipeline_mode = #tpu.pipeline_mode<synchronous>, transform_indices = @transform_1, window_bounds = array<i64: 16, 32>}, {pipeline_mode = #tpu.pipeline_mode<synchronous>, transform_indices = @transform_2, window_bounds = array<i64: 1, 32>}, {pipeline_mode = #tpu.pipeline_mode<synchronous>, transform_indices = @transform_3, window_bounds = array<i64: 32, 32>}, {pipeline_mode = #tpu.pipeline_mode<synchronous>, transform_indices = @transform_4, window_bounds = array<i64: 1, 32>}, {pipeline_mode = #tpu.pipeline_mode<synchronous>, transform_indices = @transform_5, window_bounds = array<i64: 32, 128>}, {pipeline_mode = #tpu.pipeline_mode<synchronous>, transform_indices = @transform_6, window_bounds = array<i64: 1, 128>}, {transform_indices = @transform_7, window_bounds = array<i64: 8, 128>}]} {
    %c0 = arith.constant 0 : index
    %c0_0 = arith.constant 0 : index
    %0 = vector.load %arg1[%c0, %c0_0] : memref<8x16xf32, #tpu.memory_space<vmem>>, vector<8x16xf32>
    %c0_1 = arith.constant 0 : index
    %c0_2 = arith.constant 0 : index
    %1 = vector.load %arg2[%c0_1, %c0_2] : memref<16x32xf32, #tpu.memory_space<vmem>>, vector<16x32xf32>
    %cst = arith.constant dense<0.000000e+00> : vector<8x32xf32>
    %2 = tpu.matmul %0, %1, %cst {dimension_numbers = #tpu.dot_dimension_numbers<[1], [0], [0], [1], [0, 0, 1, 1], [], []>} : vector<8x16xf32>, vector<16x32xf32>, vector<8x32xf32> -> vector<8x32xf32>
    %c0_3 = arith.constant 0 : index
    %c0_4 = arith.constant 0 : index
    %3 = vector.load %arg3[%c0_3, %c0_4] : memref<1x32xf32, #tpu.memory_space<vmem>>, vector<1x32xf32>
    %4 = vector.broadcast %3 : vector<1x32xf32> to vector<8x32xf32>
    %5 = arith.addf %2, %4 : vector<8x32xf32>
    %cst_5 = arith.constant 0.000000e+00 : f32
    %6 = vector.broadcast %cst_5 : f32 to vector<8x32xf32>
    %7 = arith.maximumf %5, %6 : vector<8x32xf32>
    %c0_6 = arith.constant 0 : index
    %c0_7 = arith.constant 0 : index
    %8 = vector.load %arg4[%c0_6, %c0_7] : memref<32x32xf32, #tpu.memory_space<vmem>>, vector<32x32xf32>
    %cst_8 = arith.constant dense<0.000000e+00> : vector<8x32xf32>
    %9 = tpu.matmul %7, %8, %cst_8 {dimension_numbers = #tpu.dot_dimension_numbers<[1], [0], [0], [1], [0, 0, 1, 1], [], []>} : vector<8x32xf32>, vector<32x32xf32>, vector<8x32xf32> -> vector<8x32xf32>
    %c0_9 = arith.constant 0 : index
    %c0_10 = arith.constant 0 : index
    %10 = vector.load %arg5[%c0_9, %c0_10] : memref<1x32xf32, #tpu.memory_space<vmem>>, vector<1x32xf32>
    %11 = vector.broadcast %10 : vector<1x32xf32> to vector<8x32xf32>
    %12 = arith.addf %9, %11 : vector<8x32xf32>
    %cst_11 = arith.constant 0.000000e+00 : f32
    %13 = vector.broadcast %cst_11 : f32 to vector<8x32xf32>
    %14 = arith.maximumf %12, %13 : vector<8x32xf32>
    %c0_12 = arith.constant 0 : index
    %c0_13 = arith.constant 0 : index
    %15 = vector.load %arg6[%c0_12, %c0_13] : memref<32x128xf32, #tpu.memory_space<vmem>>, vector<32x128xf32>
    %cst_14 = arith.constant dense<0.000000e+00> : vector<8x128xf32>
    %16 = tpu.matmul %14, %15, %cst_14 {dimension_numbers = #tpu.dot_dimension_numbers<[1], [0], [0], [1], [0, 0, 1, 1], [], []>} : vector<8x32xf32>, vector<32x128xf32>, vector<8x128xf32> -> vector<8x128xf32>
    %c0_15 = arith.constant 0 : index
    %c0_16 = arith.constant 0 : index
    %17 = vector.load %arg7[%c0_15, %c0_16] : memref<1x128xf32, #tpu.memory_space<vmem>>, vector<1x128xf32>
    %18 = vector.broadcast %17 : vector<1x128xf32> to vector<8x128xf32>
    %19 = arith.addf %16, %18 : vector<8x128xf32>
    %cst_17 = arith.constant -1.000000e+01 : f32
    %cst_18 = arith.constant 1.000000e+01 : f32
    %20 = vector.broadcast %cst_17 : f32 to vector<8x128xf32>
    %21 = arith.maximumf %20, %19 : vector<8x128xf32>
    %22 = vector.broadcast %cst_18 : f32 to vector<8x128xf32>
    %23 = arith.minimumf %22, %21 : vector<8x128xf32>
    %cst_19 = arith.constant 5.000000e-01 : f32
    %24 = vector.broadcast %cst_19 : f32 to vector<8x128xf32>
    %25 = arith.mulf %24, %19 : vector<8x128xf32>
    %26 = math.tanh %25 : vector<8x128xf32>
    %cst_20 = arith.constant 1.000000e+00 : f32
    %27 = vector.broadcast %cst_20 : f32 to vector<8x128xf32>
    %28 = arith.addf %26, %27 : vector<8x128xf32>
    %cst_21 = arith.constant 5.000000e-01 : f32
    %29 = vector.broadcast %cst_21 : f32 to vector<8x128xf32>
    %30 = arith.mulf %29, %28 : vector<8x128xf32>
    %31 = tpu.iota {dimensions = array<i32: 1>} : vector<8x128xi32>
    %c8_i32 = arith.constant 8 : i32
    %32 = vector.broadcast %c8_i32 : i32 to vector<8x128xi32>
    %33 = arith.cmpi eq, %31, %32 : vector<8x128xi32>
    %34 = arith.select %33, %30, %23 : vector<8x128xi1>, vector<8x128xf32>
    %c0_22 = arith.constant 0 : index
    %c0_23 = arith.constant 0 : index
    %35 = vector.load %arg8[%c0_22, %c0_23] : memref<8x128xf32, #tpu.memory_space<vmem>>, vector<8x128xf32>
    tpu.vector_store %arg8[%c0_22, %c0_23], %34 {strides = array<i32>} : memref<8x128xf32, #tpu.memory_space<vmem>>, vector<8x128xf32>,
    return
  }
  func.func @transform_0(%arg0: i32) -> (i32, i32) {
    %c0_i32 = arith.constant 0 : i32
    %c0_i32_0 = arith.constant 0 : i32
    return %arg0, %c0_i32 : i32, i32
  }
  func.func @transform_1(%arg0: i32) -> (i32, i32) {
    %c0_i32 = arith.constant 0 : i32
    %c0_i32_0 = arith.constant 0 : i32
    %c0_i32_1 = arith.constant 0 : i32
    return %c0_i32, %c0_i32_0 : i32, i32
  }
  func.func @transform_2(%arg0: i32) -> (i32, i32) {
    %c0_i32 = arith.constant 0 : i32
    %c0_i32_0 = arith.constant 0 : i32
    %c0_i32_1 = arith.constant 0 : i32
    return %c0_i32, %c0_i32_0 : i32, i32
  }
  func.func @transform_3(%arg0: i32) -> (i32, i32) {
    %c0_i32 = arith.constant 0 : i32
    %c0_i32_0 = arith.constant 0 : i32
    %c0_i32_1 = arith.constant 0 : i32
    return %c0_i32, %c0_i32_0 : i32, i32
  }
  func.func @transform_4(%arg0: i32) -> (i32, i32) {
    %c0_i32 = arith.constant 0 : i32
    %c0_i32_0 = arith.constant 0 : i32
    %c0_i32_1 = arith.constant 0 : i32
    return %c0_i32, %c0_i32_0 : i32, i32
  }
  func.func @transform_5(%arg0: i32) -> (i32, i32) {
    %c0_i32 = arith.constant 0 : i32
    %c0_i32_0 = arith.constant 0 : i32
    %c0_i32_1 = arith.constant 0 : i32
    return %c0_i32, %c0_i32_0 : i32, i32
  }
  func.func @transform_6(%arg0: i32) -> (i32, i32) {
    %c0_i32 = arith.constant 0 : i32
    %c0_i32_0 = arith.constant 0 : i32
    %c0_i32_1 = arith.constant 0 : i32
    return %c0_i32, %c0_i32_0 : i32, i32
  }
  func.func @transform_7(%arg0: i32) -> (i32, i32) {
    %c0_i32 = arith.constant 0 : i32
    %c0_i32_0 = arith.constant 0 : i32
    return %arg0, %c0_i32 : i32, i32
  }
}

</mosaic_0001>

<llo_original>
// kernel: policy_forward.1
$region0: #{policy_forward.1}
  #allocation0 [shape = 'u32[]', space=smem, size = 0x4, offset = 0x4, fixed_abs, tag = 'smem constant byte address 0x4 - core index']
  #allocation1 [shape = 'u32[144,128]{1,0:T(1,128)}', space=vmem, size = 0x12000, scoped, tag = 'internal scratch']
  %s0 = inlined_call_operand.vmem [shape: f32[8,16], index: 0, kind: input, shape index: {}]
  %s1 = inlined_call_operand.vmem [shape: f32[16,32], index: 1, kind: input, shape index: {}]
  %s2 = inlined_call_operand.vmem [shape: f32[1,32], index: 2, kind: input, shape index: {}]
  %s3 = inlined_call_operand.hbm [shape: f32[32,32], index: 3, kind: input, shape index: {}]
  %s4 = inlined_call_operand.vmem [shape: f32[1,32], index: 4, kind: input, shape index: {}]
  %s5 = inlined_call_operand.hbm [shape: f32[32,128], index: 5, kind: input, shape index: {}]
  %s6 = inlined_call_operand.hbm [shape: f32[1,128], index: 6, kind: input, shape index: {}]
  %s7 = inlined_call_operand.vmem [shape: f32[8,128], index: 7, kind: output, shape index: {}]
  %s8 = sld [smem:[#allocation0]]
  $region50: #{policy_forward.1} parent=0
    _
  %s10 = ssub.s32 1, %s8
  %s11 = scalar_select 0, %s10, %s8
  $region1: #{policy_forward.1} parent=0
    #allocation2 [shape = 'u8[16384]{0}', space=vmem, size = 0x4000, scoped, tag = 'input window, operand 3, single buffered']
    #allocation3 [shape = 's32[1]{0}', space=sflag, size = 0x4, scoped, tag = 'scoped memory for policy_forward.1']
    #allocation4 [shape = 'u8[16384]{0}', space=vmem, size = 0x4000, scoped, tag = 'input window, operand 5, single buffered']
    #allocation5 [shape = 's32[1]{0}', space=sflag, size = 0x4, scoped, tag = 'scoped memory for policy_forward.1']
    #allocation6 [shape = 'u8[512]{0}', space=vmem, size = 0x400, scoped, tag = 'input window, operand 6, single buffered']
    %12 = vsyncpa [#allocation3], 0
    %13 = vsyncpa [#allocation5], 0
    // Predicated region
    $region2: #{policy_forward.1} parent=1 // pred_check
      _
    $region3: #{policy_forward.1} parent=1 // pred_check_branch
      %15 = sbr.rel (0) target = $region5
    $region4: #{policy_forward.1} parent=1 // pred_region
      _
    $region5: #{policy_forward.1} parent=1 // pred_fallthru
      _
    // Predicated region
    $region6: #{policy_forward.1} parent=1 // pred_check
      _
    $region7: #{policy_forward.1} parent=1 // pred_check_branch
      %17 = sbr.rel (0) target = $region9
    $region8: #{policy_forward.1} parent=1 // pred_region
      _
    $region9: #{policy_forward.1} parent=1 // pred_fallthru
      _
    // Predicated region
    $region10: #{policy_forward.1} parent=1 // pred_check
      _
    $region11: #{policy_forward.1} parent=1 // pred_check_branch
      %19 = sbr.rel (0) target = $region13
    $region12: #{policy_forward.1} parent=1 // pred_region
      _
    $region13: #{policy_forward.1} parent=1 // pred_fallthru
      _
    // Predicated region
    $region14: #{policy_forward.1} parent=1 // pred_check
      _
    $region15: #{policy_forward.1} parent=1 // pred_check_branch
      %21 = sbr.rel (0) target = $region17
    $region16: #{policy_forward.1} parent=1 // pred_region
      %s23 = ssub.s32 512, 512
      %24 = vsyncadd [#allocation3], %s23
      %s25 = sshll.u32 [#allocation2], 4
      %s26 = int_to_ptr.vmem [resolvable:$true] %s25
      %31 = dma.hbm_to_vmem [thread:$0]  %s3, 512, %s26, [#allocation3], 128, 128, 8
    $region17: #{policy_forward.1} parent=1 // pred_fallthru
      _
    // Predicated region
    $region18: #{policy_forward.1} parent=1 // pred_check
      _
    $region19: #{policy_forward.1} parent=1 // pred_check_branch
      %33 = sbr.rel (0) target = $region21
    $region20: #{policy_forward.1} parent=1 // pred_region
      _
    $region21: #{policy_forward.1} parent=1 // pred_fallthru
      _
    // Predicated region
    $region22: #{policy_forward.1} parent=1 // pred_check
      _
    $region23: #{policy_forward.1} parent=1 // pred_check_branch
      %35 = sbr.rel (0) target = $region25
    $region24: #{policy_forward.1} parent=1 // pred_region
      %s37 = ssub.s32 512, 512
      %38 = vsyncadd [#allocation5], %s37
      %s39 = sshll.u32 [#allocation4], 4
      %s40 = int_to_ptr.vmem [resolvable:$true] %s39
      %45 = dma.hbm_to_vmem [thread:$0]  %s5, 512, %s40, [#allocation5], 128, 128, 8
    $region25: #{policy_forward.1} parent=1 // pred_fallthru
      _
    // Predicated region
    $region26: #{policy_forward.1} parent=1 // pred_check
      _
    $region27: #{policy_forward.1} parent=1 // pred_check_branch
      %47 = sbr.rel (0) target = $region29
    $region28: #{policy_forward.1} parent=1 // pred_region
      %s49 = ssub.s32 16, 16
      %50 = vsyncadd [#allocation5], %s49
      %s52 = sshll.u32 [#allocation6], 4
      %s53 = int_to_ptr.vmem [resolvable:$true] %s52
      %55 = dma.hbm_to_vmem [thread:$0]  %s6, 16, %s53, [#allocation5]
    $region29: #{policy_forward.1} parent=1 // pred_fallthru
      _
    // Predicated region
    $region30: #{policy_forward.1} parent=1 // pred_check
      _
    $region31: #{policy_forward.1} parent=1 // pred_check_branch
      %57 = sbr.rel (0) target = $region33
    $region32: #{policy_forward.1} parent=1 // pred_region
      %58 = dma.done [#allocation3], 512
    $region33: #{policy_forward.1} parent=1 // pred_fallthru
      _
    // Predicated region
    $region34: #{policy_forward.1} parent=1 // pred_check
      _
    $region35: #{policy_forward.1} parent=1 // pred_check_branch
      %60 = sbr.rel (0) target = $region37
    $region36: #{policy_forward.1} parent=1 // pred_region
      %61 = dma.done [#allocation5], 512
    $region37: #{policy_forward.1} parent=1 // pred_fallthru
      _
    // Predicated region
    $region38: #{policy_forward.1} parent=1 // pred_check
      _
    $region39: #{policy_forward.1} parent=1 // pred_check_branch
      %63 = sbr.rel (0) target = $region41
    $region40: #{policy_forward.1} parent=1 // pred_region
      %64 = dma.done [#allocation5], 16
    $region41: #{policy_forward.1} parent=1 // pred_fallthru
      _
    %v65 = vld [vmem:[%s0] sm:$0xff]
    %v66 = vld [vmem:[%s1] sm:$0xff]
    %v67 = vld [vmem:[%s1 + $0x8] sm:$0xff]
    %v68 = vld [vmem:[%s2] sm:$0x1]
    %v70 = vlaneseq
    %v71 = vshrl.u32 %v70, 7
    %v72 = vsub.s32 0, %v71
    %v73 = vrot.slane %v68, %v72
    %vm75 = vcmask 130048
    %v77 = vsel %vm75, %v65, 0
    %79 = vmatprep.subr.mxu0 0.0
    %80 = vmatpush1.msra.mxu0 0.0
    %81 = vmatprep.subr.mxu0 0.0
    %82 = vmatpush1.msra.mxu0 0.0
    %83 = vmatprep.subr.mxu0 0.0
    %84 = vmatpush1.msra.mxu0 0.0
    %85 = vmatprep.subr.mxu0 0.0
    %86 = vmatpush1.msra.mxu0 0.0
    %87 = vmatprep.subr.mxu0 0.0
    %88 = vmatpush1.msra.mxu0 0.0
    %89 = vmatprep.subr.mxu0 0.0
    %90 = vmatpush1.msra.mxu0 0.0
    %91 = vmatprep.subr.mxu0 0.0
    %92 = vmatpush1.msra.mxu0 0.0
    %93 = vmatprep.subr.mxu0 0.0
    %94 = vmatpush1.msra.mxu0 0.0
    %95 = vmatprep.subr.mxu0 0.0
    %96 = vmatpush1.msra.mxu0 0.0
    %97 = vmatprep.subr.mxu0 0.0
    %98 = vmatpush1.msra.mxu0 0.0
    %99 = vmatprep.subr.mxu0 0.0
    %100 = vmatpush1.msra.mxu0 0.0
    %101 = vmatprep.subr.mxu0 0.0
    %102 = vmatpush1.msra.mxu0 0.0
    %103 = vmatprep.subr.mxu0 0.0
    %104 = vmatpush1.msra.mxu0 0.0
    %105 = vmatprep.subr.mxu0 0.0
    %106 = vmatpush1.msra.mxu0 0.0
    %107 = vmatprep.subr.mxu0 0.0
    %108 = vmatpush1.msra.mxu0 %v67
    %109 = vmatprep.subr.mxu0 0.0
    %110 = vmatpush1.msra.mxu0 %v66
    %111 = vmatprep.subr.mxu0 0.0
    %112 = vmatpush2.msra.mxu0 0.0
    %113 = vmatprep.subr.mxu0 0.0
    %114 = vmatpush2.msra.mxu0 0.0
    %115 = vmatprep.subr.mxu0 0.0
    %116 = vmatpush2.msra.mxu0 0.0
    %117 = vmatprep.subr.mxu0 0.0
    %118 = vmatpush2.msra.mxu0 0.0
    %119 = vmatprep.subr.mxu0 0.0
    %120 = vmatpush2.msra.mxu0 0.0
    %121 = vmatprep.subr.mxu0 0.0
    %122 = vmatpush2.msra.mxu0 0.0
    %123 = vmatprep.subr.mxu0 0.0
    %124 = vmatpush2.msra.mxu0 0.0
    %125 = vmatprep.subr.mxu0 0.0
    %126 = vmatpush2.msra.mxu0 0.0
    %127 = vmatprep.subr.mxu0 0.0
    %128 = vmatpush2.msra.mxu0 0.0
    %129 = vmatprep.subr.mxu0 0.0
    %130 = vmatpush2.msra.mxu0 0.0
    %131 = vmatprep.subr.mxu0 0.0
    %132 = vmatpush2.msra.mxu0 0.0
    %133 = vmatprep.subr.mxu0 0.0
    %134 = vmatpush2.msra.mxu0 0.0
    %135 = vmatprep.subr.mxu0 0.0
    %136 = vmatpush2.msra.mxu0 0.0
    %137 = vmatprep.subr.mxu0 0.0
    %138 = vmatpush2.msra.mxu0 0.0
    %139 = vmatprep.subr.mxu0 0.0
    %140 = vmatpush2.msra.mxu0 0.0
    %141 = vmatprep.subr.mxu0 0.0
    %142 = vmatpush2.msra.mxu0 0.0
    %143 = vmatprep.mubr.f32.mxu0 0.0
    %144 = vmatmul.mubr.f32.gmra.mxu0 %v77
    %v145 = vpop.f32.mrf.mxu0
    %v146 = vadd.f32 %v73, %v145
    %v147 = vpop.f32.mrf.mxu0
    %148 = vdwg.mxu0
    %v149 = vmax.f32 %v146, 0.0
    %v150 = vld [vmem:[#allocation2] sm:$0xff]
    %v151 = vld [vmem:[#allocation2 + $0x8] sm:$0xff]
    %v152 = vld [vmem:[#allocation2 + $0x10] sm:$0xff]
    %v153 = vld [vmem:[#allocation2 + $0x18] sm:$0xff]
    %v154 = vld [vmem:[%s4] sm:$0x1]
    %v156 = vlaneseq
    %v157 = vshrl.u32 %v156, 7
    %v158 = vsub.s32 0, %v157
    %v159 = vrot.slane %v154, %v158
    %vm161 = vcmask 261120
    %v163 = vsel %vm161, %v149, 0
    %165 = vmatprep.subr.mxu0 0.0
    %166 = vmatpush1.msra.mxu0 0.0
    %167 = vmatprep.subr.mxu0 0.0
    %168 = vmatpush1.msra.mxu0 0.0
    %169 = vmatprep.subr.mxu0 0.0
    %170 = vmatpush1.msra.mxu0 0.0
    %171 = vmatprep.subr.mxu0 0.0
    %172 = vmatpush1.msra.mxu0 0.0
    %173 = vmatprep.subr.mxu0 0.0
    %174 = vmatpush1.msra.mxu0 0.0
    %175 = vmatprep.subr.mxu0 0.0
    %176 = vmatpush1.msra.mxu0 0.0
    %177 = vmatprep.subr.mxu0 0.0
    %178 = vmatpush1.msra.mxu0 0.0
    %179 = vmatprep.subr.mxu0 0.0
    %180 = vmatpush1.msra.mxu0 0.0
    %181 = vmatprep.subr.mxu0 0.0
    %182 = vmatpush1.msra.mxu0 0.0
    %183 = vmatprep.subr.mxu0 0.0
    %184 = vmatpush1.msra.mxu0 0.0
    %185 = vmatprep.subr.mxu0 0.0
    %186 = vmatpush1.msra.mxu0 0.0
    %187 = vmatprep.subr.mxu0 0.0
    %188 = vmatpush1.msra.mxu0 0.0
    %189 = vmatprep.subr.mxu0 0.0
    %190 = vmatpush1.msra.mxu0 %v153
    %191 = vmatprep.subr.mxu0 0.0
    %192 = vmatpush1.msra.mxu0 %v152
    %193 = vmatprep.subr.mxu0 0.0
    %194 = vmatpush1.msra.mxu0 %v151
    %195 = vmatprep.subr.mxu0 0.0
    %196 = vmatpush1.msra.mxu0 %v150
    %197 = vmatprep.subr.mxu0 0.0
    %198 = vmatpush2.msra.mxu0 0.0
    %199 = vmatprep.subr.mxu0 0.0
    %200 = vmatpush2.msra.mxu0 0.0
    %201 = vmatprep.subr.mxu0 0.0
    %202 = vmatpush2.msra.mxu0 0.0
    %203 = vmatprep.subr.mxu0 0.0
    %204 = vmatpush2.msra.mxu0 0.0
    %205 = vmatprep.subr.mxu0 0.0
    %206 = vmatpush2.msra.mxu0 0.0
    %207 = vmatprep.subr.mxu0 0.0
    %208 = vmatpush2.msra.mxu0 0.0
    %209 = vmatprep.subr.mxu0 0.0
    %210 = vmatpush2.msra.mxu0 0.0
    %211 = vmatprep.subr.mxu0 0.0
    %212 = vmatpush2.msra.mxu0 0.0
    %213 = vmatprep.subr.mxu0 0.0
    %214 = vmatpush2.msra.mxu0 0.0
    %215 = vmatprep.subr.mxu0 0.0
    %216 = vmatpush2.msra.mxu0 0.0
    %217 = vmatprep.subr.mxu0 0.0
    %218 = vmatpush2.msra.mxu0 0.0
    %219 = vmatprep.subr.mxu0 0.0
    %220 = vmatpush2.msra.mxu0 0.0
    %221 = vmatprep.subr.mxu0 0.0
    %222 = vmatpush2.msra.mxu0 0.0
    %223 = vmatprep.subr.mxu0 0.0
    %224 = vmatpush2.msra.mxu0 0.0
    %225 = vmatprep.subr.mxu0 0.0
    %226 = vmatpush2.msra.mxu0 0.0
    %227 = vmatprep.subr.mxu0 0.0
    %228 = vmatpush2.msra.mxu0 0.0
    %229 = vmatprep.mubr.f32.mxu0 0.0
    %230 = vmatmul.mubr.f32.gmra.mxu0 %v163
    %v231 = vpop.f32.mrf.mxu0
    %v232 = vadd.f32 %v159, %v231
    %v233 = vpop.f32.mrf.mxu0
    %234 = vdwg.mxu0
    %v235 = vmax.f32 %v232, 0.0
    %v236 = vld [vmem:[#allocation4] sm:$0xff]
    %v237 = vld [vmem:[#allocation4 + $0x8] sm:$0xff]
    %v238 = vld [vmem:[#allocation4 + $0x10] sm:$0xff]
    %v239 = vld [vmem:[#allocation4 + $0x18] sm:$0xff]
    %v240 = vld [vmem:[#allocation6] sm:$0x1]
    %v242 = vlaneseq
    %v243 = vshrl.u32 %v242, 7
    %v244 = vsub.s32 0, %v243
    %v245 = vrot.slane %v240, %v244
    %v248 = vsel %vm161, %v235, 0
    %250 = vmatprep.subr.mxu0 0.0
    %251 = vmatpush1.msra.mxu0 0.0
    %252 = vmatprep.subr.mxu0 0.0
    %253 = vmatpush1.msra.mxu0 0.0
    %254 = vmatprep.subr.mxu0 0.0
    %255 = vmatpush1.msra.mxu0 0.0
    %256 = vmatprep.subr.mxu0 0.0
    %257 = vmatpush1.msra.mxu0 0.0
    %258 = vmatprep.subr.mxu0 0.0
    %259 = vmatpush1.msra.mxu0 0.0
    %260 = vmatprep.subr.mxu0 0.0
    %261 = vmatpush1.msra.mxu0 0.0
    %262 = vmatprep.subr.mxu0 0.0
    %263 = vmatpush1.msra.mxu0 0.0
    %264 = vmatprep.subr.mxu0 0.0
    %265 = vmatpush1.msra.mxu0 0.0
    %266 = vmatprep.subr.mxu0 0.0
    %267 = vmatpush1.msra.mxu0 0.0
    %268 = vmatprep.subr.mxu0 0.0
    %269 = vmatpush1.msra.mxu0 0.0
    %270 = vmatprep.subr.mxu0 0.0
    %271 = vmatpush1.msra.mxu0 0.0
    %272 = vmatprep.subr.mxu0 0.0
    %273 = vmatpush1.msra.mxu0 0.0
    %274 = vmatprep.subr.mxu0 0.0
    %275 = vmatpush1.msra.mxu0 %v239
    %276 = vmatprep.subr.mxu0 0.0
    %277 = vmatpush1.msra.mxu0 %v238
    %278 = vmatprep.subr.mxu0 0.0
    %279 = vmatpush1.msra.mxu0 %v237
    %280 = vmatprep.subr.mxu0 0.0
    %281 = vmatpush1.msra.mxu0 %v236
    %282 = vmatprep.subr.mxu0 0.0
    %283 = vmatpush2.msra.mxu0 0.0
    %284 = vmatprep.subr.mxu0 0.0
    %285 = vmatpush2.msra.mxu0 0.0
    %286 = vmatprep.subr.mxu0 0.0
    %287 = vmatpush2.msra.mxu0 0.0
    %288 = vmatprep.subr.mxu0 0.0
    %289 = vmatpush2.msra.mxu0 0.0
    %290 = vmatprep.subr.mxu0 0.0
    %291 = vmatpush2.msra.mxu0 0.0
    %292 = vmatprep.subr.mxu0 0.0
    %293 = vmatpush2.msra.mxu0 0.0
    %294 = vmatprep.subr.mxu0 0.0
    %295 = vmatpush2.msra.mxu0 0.0
    %296 = vmatprep.subr.mxu0 0.0
    %297 = vmatpush2.msra.mxu0 0.0
    %298 = vmatprep.subr.mxu0 0.0
    %299 = vmatpush2.msra.mxu0 0.0
    %300 = vmatprep.subr.mxu0 0.0
    %301 = vmatpush2.msra.mxu0 0.0
    %302 = vmatprep.subr.mxu0 0.0
    %303 = vmatpush2.msra.mxu0 0.0
    %304 = vmatprep.subr.mxu0 0.0
    %305 = vmatpush2.msra.mxu0 0.0
    %306 = vmatprep.subr.mxu0 0.0
    %307 = vmatpush2.msra.mxu0 0.0
    %308 = vmatprep.subr.mxu0 0.0
    %309 = vmatpush2.msra.mxu0 0.0
    %310 = vmatprep.subr.mxu0 0.0
    %311 = vmatpush2.msra.mxu0 0.0
    %312 = vmatprep.subr.mxu0 0.0
    %313 = vmatpush2.msra.mxu0 0.0
    %314 = vmatprep.mubr.f32.mxu0 0.0
    %315 = vmatmul.mubr.f32.gmra.mxu0 %v248
    %v316 = vpop.f32.mrf.mxu0
    %v317 = vadd.f32 %v245, %v316
    %v318 = vpop.f32.mrf.mxu0
    %319 = vdwg.mxu0
    %v320 = vmax.f32 %v317, -10.0
    %v321 = vmin.f32 %v320, 10.0
    %v322 = vmul.f32 %v317, 0.5
    %v323 = vtanh.pop %v322
    %v324 = vadd.f32 %v323, 1.0
    %v325 = vmul.f32 %v324, 0.5
    %v326 = vlaneseq
    %v327 = vand.u32 %v326, 127
    %vm328 = vcmp.eq.s32.totalorder %v327, 8
    %v329 = vsel %vm328, %v325, %v321
    %330 = vst [vmem:[%s7] sm:$0xff] %v329
    // Predicated region
    $region42: #{policy_forward.1} parent=1 // pred_check
      _
    $region43: #{policy_forward.1} parent=1 // pred_check_branch
      %332 = sbr.rel (0) target = $region45
    $region44: #{policy_forward.1} parent=1 // pred_region
      _
    $region45: #{policy_forward.1} parent=1 // pred_fallthru
      _
    // Predicated region
    $region46: #{policy_forward.1} parent=1 // pred_check
      _
    $region47: #{policy_forward.1} parent=1 // pred_check_branch
      %334 = sbr.rel (0) target = $region49
    $region48: #{policy_forward.1} parent=1 // pred_region
      _
    $region49: #{policy_forward.1} parent=1 // pred_fallthru
      _
    %335 = vsyncpa [#allocation3], 1
    %336 = vsyncpa [#allocation5], 1

</llo_original>
